<compile_context>
chip_gen: v5e
topology: v5e:2x2
jax: 0.10.0
libtpu: 0.0.40
codegen_flags: <defaults>
</compile_context>

<pallas_src>
import math
from functools import partial

import jax
import jax.numpy as jnp
from jax.experimental import pallas as pl
from jax.experimental.pallas import tpu as pltpu

LOG_SQRT_2PI = 0.5 * math.log(2.0 * math.pi)


def gaussian_policy_kernel(inp_ref, w1_ref, b1_ref, w2_ref, b2_ref, w3_ref, b3_ref,
                           scale_ref, sel_ref, const_ref, out_ref, *,
                           obs_dim, act_dim):
    # Single packed batch tile: [x | eps | action_taken]  (TB, OBS + 2A)
    inp = inp_ref[...]
    x = inp[:, :obs_dim]
    eps = inp[:, obs_dim:obs_dim + act_dim]
    act = inp[:, obs_dim + act_dim:]

    # ----- MLP (3 MXU matmuls + tanh on EUP) -----
    h1 = jnp.tanh(jnp.dot(x, w1_ref[...], preferred_element_type=jnp.float32)
                  + b1_ref[...])
    h2 = jnp.tanh(jnp.dot(h1, w2_ref[...], preferred_element_type=jnp.float32)
                  + b2_ref[...])
    mu = jnp.dot(h2, w3_ref[...], preferred_element_type=jnp.float32) + b3_ref[...]

    # ----- Normal(mu, std): sample + log-probs -----
    scale = scale_ref[...]                 # (2, A): row 0 = std, row 1 = 1/std
    std = scale[0:1, :]
    inv_std = scale[1:2, :]

    pi = mu + std * eps                    # sample

    # (pi - mu)/std == eps by construction -> use eps directly for logp_pi.
    z = (act - mu) * inv_std               # standardized action_taken
    sq = jnp.concatenate([z * z, eps * eps], axis=1)          # (TB, 2A)

    # One tiny MXU matmul does both reductions AND packs [logp, logp_pi] lane-dense.
    # sel (2A, 2) has -0.5 in the block pattern; const = -sum(log_std) - A*log(sqrt(2pi)).
    logp_pack = (jnp.dot(sq, sel_ref[...], preferred_element_type=jnp.float32)
                 + const_ref[...])                             # (TB, 2)

    # Single merged output store: [pi | logp | logp_pi]  (TB, A + 2)
    out_ref[...] = jnp.concatenate([pi, logp_pack], axis=1)


def _round_up(n, m):
    return (n + m - 1) // m * m


def gaussian_policy_forward(x, params, eps, action_taken, *,
                            max_block=4096, min_grid_steps=1):
    """Pallas forward. Returns (pi, logp, logp_pi).

    min_grid_steps: keep 1 on v5e/v6e (single TensorCore); set 2 on v7x so the
    "parallel" batch axis is sharded across both TensorCores.
    """
    w1, b1, w2, b2, w3, b3, log_std = params
    B, OBS = x.shape
    H1 = w1.shape[1]
    H2 = w2.shape[1]
    A = w3.shape[1]

    # ---- grid-invariant quantities hoisted out of the kernel ----
    log_std = log_std.reshape(1, A).astype(jnp.float32)
    std = jnp.exp(log_std)
    inv_std = jnp.exp(-log_std)
    scale = jnp.concatenate([std, inv_std], axis=0)                 # (2, A)
    const = -(jnp.sum(log_std) + jnp.float32(A * LOG_SQRT_2PI))
    const2 = jnp.full((1, 2), 1.0, jnp.float32) * const             # (1, 2)
    sel = -0.5 * jnp.repeat(jnp.eye(2, dtype=jnp.float32), A, axis=0)  # (2A, 2)

    # ---- tiling: grow TB so the grid collapses to min_grid_steps ----
    Bp8 = _round_up(B, 8)
    nb = max(min_grid_steps, pl.cdiv(Bp8, max_block))
    TB = _round_up(pl.cdiv(Bp8, nb), 8)
    Bp = nb * TB

    IN_W = OBS + 2 * A
    OUT_W = A + 2

    # One packed input stream: [x | eps | action_taken]; pad once (if at all).
    packed = jnp.concatenate([x, eps, action_taken], axis=1)        # (B, IN_W)
    if Bp != B:
        packed = jnp.pad(packed, ((0, Bp - B), (0, 0)))

    def batch_spec(d):
        return pl.BlockSpec((TB, d), lambda i: (i, 0))

    def resident_spec(arr):
        # Constant block index across the batch grid -> stays resident in VMEM.
        return pl.BlockSpec(arr.shape, lambda i: (0, 0))

    # Advisory cost estimate for XLA's scheduler.
    matmul_flops = 2 * Bp * (OBS * H1 + H1 * H2 + H2 * A + 2 * A * 2)
    elem_flops = Bp * (H1 + H2 + 7 * A + 2)
    transcendentals = Bp * (H1 + H2)
    bytes_accessed = 4 * (Bp * (IN_W + OUT_W)
                          + OBS * H1 + H1 + H1 * H2 + H2 + H2 * A + A
                          + 2 * A + 2 * A * 2 + 2)

    out = pl.pallas_call(
        partial(gaussian_policy_kernel, obs_dim=OBS, act_dim=A),
        out_shape=jax.ShapeDtypeStruct((Bp, OUT_W), jnp.float32),
        grid=(nb,),
        in_specs=[
            batch_spec(IN_W),                         # packed [x | eps | action]
            resident_spec(w1), resident_spec(b1),
            resident_spec(w2), resident_spec(b2),
            resident_spec(w3), resident_spec(b3),
            resident_spec(scale), resident_spec(sel), resident_spec(const2),
        ],
        out_specs=batch_spec(OUT_W),
        compiler_params=pltpu.CompilerParams(
            dimension_semantics=("parallel",)),
        cost_estimate=pl.CostEstimate(
            flops=matmul_flops + elem_flops,
            transcendentals=transcendentals,
            bytes_accessed=bytes_accessed),
    )(packed, w1, b1, w2, b2, w3, b3, scale, sel, const2)

    if Bp != B:
        out = out[:B]
    pi = out[:, :A]
    logp = out[:, A]
    logp_pi = out[:, A + 1]
    return pi, logp, logp_pi


def init_params(key, obs_dim, hidden_sizes, action_dim):
    """Deterministic parameter init. Biases are zero (matches nn.init.zeros_),
    log_std = -0.5 * ones(action_dim) (matches the module __init__)."""
    sizes = [obs_dim] + list(hidden_sizes) + [action_dim]
    keys = jax.random.split(key, len(sizes) - 1)
    params = []
    for i, (din, dout) in enumerate(zip(sizes[:-1], sizes[1:])):
        bound = 1.0 / math.sqrt(float(din))
        w = jax.random.uniform(keys[i], (din, dout), jnp.float32, -bound, bound)
        b = jnp.zeros((1, dout), jnp.float32)
        params.extend([w, b])
    log_std = jnp.full((1, action_dim), -0.5, jnp.float32)
    params.append(log_std)
    return tuple(params)


def reference_forward(x, params, eps, action_taken):
    """Pure-JAX reference mirroring the PyTorch module (correctness check)."""
    w1, b1, w2, b2, w3, b3, log_std = params
    h1 = jnp.tanh(x @ w1 + b1)
    h2 = jnp.tanh(h1 @ w2 + b2)
    mu = h2 @ w3 + b3
    std = jnp.exp(log_std)
    pi = mu + std * eps

    def log_prob(v):
        z = (v - mu) / std
        return -0.5 * z * z - log_std - LOG_SQRT_2PI

    logp_pi = jnp.sum(log_prob(pi), axis=1)
    logp = jnp.sum(log_prob(action_taken), axis=1)
    return pi, logp, logp_pi


if __name__ == "__main__":
    key = jax.random.PRNGKey(0)
    k_param, k_x, k_eps, k_act = jax.random.split(key, 4)

    B, OBS, A = 8, 16, 4
    HIDDEN = (32, 32)

    params = init_params(k_param, OBS, HIDDEN, A)
    x = jax.random.normal(k_x, (B, OBS), jnp.float32)
    eps = jax.random.normal(k_eps, (B, A), jnp.float32)        # Normal.sample() noise
    action_taken = jax.random.normal(k_act, (B, A), jnp.float32)

    pi, logp, logp_pi = gaussian_policy_forward(x, params, eps, action_taken)
    jax.block_until_ready((pi, logp, logp_pi))

    assert pi.shape == (B, A)
    assert logp.shape == (B,)
    assert logp_pi.shape == (B,)

    pi_r, logp_r, logp_pi_r = reference_forward(x, params, eps, action_taken)
    assert jnp.allclose(pi, pi_r, atol=1e-3, rtol=1e-3)
    assert jnp.allclose(logp, logp_r, atol=1e-3, rtol=1e-3)
    assert jnp.allclose(logp_pi, logp_pi_r, atol=1e-3, rtol=1e-3)

    # TODO(synk): eps could be generated on-chip via pltpu.prng_seed/stateful_normal
    # (removes one input column block) at the cost of host-reproducible sampling.
    # TODO(synk): optional bf16 MLP path (v6e/v7x only) if the EUP tanh ever binds.
    print("KERNEL_OK")
</pallas_src>

<mosaic_0001>
module attributes {stable_mosaic.version = 11 : i64} {
  func.func @gaussian_policy_kernel(%arg0: i32, %arg1: memref<8x24xf32, #tpu.memory_space<vmem>>, %arg2: memref<16x32xf32, #tpu.memory_space<vmem>>, %arg3: memref<1x32xf32, #tpu.memory_space<vmem>>, %arg4: memref<32x32xf32, #tpu.memory_space<vmem>>, %arg5: memref<1x32xf32, #tpu.memory_space<vmem>>, %arg6: memref<32x4xf32, #tpu.memory_space<vmem>>, %arg7: memref<1x4xf32, #tpu.memory_space<vmem>>, %arg8: memref<2x4xf32, #tpu.memory_space<vmem>>, %arg9: memref<8x2xf32, #tpu.memory_space<vmem>>, %arg10: memref<1x2xf32, #tpu.memory_space<vmem>>, %arg11: memref<8x6xf32, #tpu.memory_space<vmem>>) attributes {dimension_semantics = [#tpu.dimension_semantics<parallel>], iteration_bounds = array<i64: 1>, scalar_prefetch = 0 : i64, scratch_operands = 0 : i64, tpu.core_type = #tpu.core_type<tc>, window_params = [{transform_indices = @transform_0, window_bounds = array<i64: 8, 24>}, {pipeline_mode = #tpu.pipeline_mode<synchronous>, transform_indices = @transform_1, window_bounds = array<i64: 16, 32>}, {pipeline_mode = #tpu.pipeline_mode<synchronous>, transform_indices = @transform_2, window_bounds = array<i64: 1, 32>}, {pipeline_mode = #tpu.pipeline_mode<synchronous>, transform_indices = @transform_3, window_bounds = array<i64: 32, 32>}, {pipeline_mode = #tpu.pipeline_mode<synchronous>, transform_indices = @transform_4, window_bounds = array<i64: 1, 32>}, {pipeline_mode = #tpu.pipeline_mode<synchronous>, transform_indices = @transform_5, window_bounds = array<i64: 32, 4>}, {pipeline_mode = #tpu.pipeline_mode<synchronous>, transform_indices = @transform_6, window_bounds = array<i64: 1, 4>}, {pipeline_mode = #tpu.pipeline_mode<synchronous>, transform_indices = @transform_7, window_bounds = array<i64: 2, 4>}, {pipeline_mode = #tpu.pipeline_mode<synchronous>, transform_indices = @transform_8, window_bounds = array<i64: 8, 2>}, {pipeline_mode = #tpu.pipeline_mode<synchronous>, transform_indices = @transform_9, window_bounds = array<i64: 1, 2>}, {transform_indices = @transform_10, window_bounds = array<i64: 8, 6>}]} {
    %c0 = arith.constant 0 : index
    %c0_0 = arith.constant 0 : index
    %0 = vector.load %arg1[%c0, %c0_0] : memref<8x24xf32, #tpu.memory_space<vmem>>, vector<8x24xf32>
    %1 = vector.extract_strided_slice %0 {offsets = [0, 0], sizes = [8, 16], strides = [1, 1]} : vector<8x24xf32> to vector<8x16xf32>
    %2 = vector.extract_strided_slice %0 {offsets = [0, 16], sizes = [8, 4], strides = [1, 1]} : vector<8x24xf32> to vector<8x4xf32>
    %3 = vector.extract_strided_slice %0 {offsets = [0, 20], sizes = [8, 4], strides = [1, 1]} : vector<8x24xf32> to vector<8x4xf32>
    %c0_1 = arith.constant 0 : index
    %c0_2 = arith.constant 0 : index
    %4 = vector.load %arg2[%c0_1, %c0_2] : memref<16x32xf32, #tpu.memory_space<vmem>>, vector<16x32xf32>
    %cst = arith.constant dense<0.000000e+00> : vector<8x32xf32>
    %5 = tpu.matmul %1, %4, %cst {dimension_numbers = #tpu.dot_dimension_numbers<[1], [0], [0], [1], [0, 0, 1, 1], [], []>} : vector<8x16xf32>, vector<16x32xf32>, vector<8x32xf32> -> vector<8x32xf32>
    %c0_3 = arith.constant 0 : index
    %c0_4 = arith.constant 0 : index
    %6 = vector.load %arg3[%c0_3, %c0_4] : memref<1x32xf32, #tpu.memory_space<vmem>>, vector<1x32xf32>
    %7 = vector.broadcast %6 : vector<1x32xf32> to vector<8x32xf32>
    %8 = arith.addf %5, %7 : vector<8x32xf32>
    %9 = math.tanh %8 : vector<8x32xf32>
    %c0_5 = arith.constant 0 : index
    %c0_6 = arith.constant 0 : index
    %10 = vector.load %arg4[%c0_5, %c0_6] : memref<32x32xf32, #tpu.memory_space<vmem>>, vector<32x32xf32>
    %cst_7 = arith.constant dense<0.000000e+00> : vector<8x32xf32>
    %11 = tpu.matmul %9, %10, %cst_7 {dimension_numbers = #tpu.dot_dimension_numbers<[1], [0], [0], [1], [0, 0, 1, 1], [], []>} : vector<8x32xf32>, vector<32x32xf32>, vector<8x32xf32> -> vector<8x32xf32>
    %c0_8 = arith.constant 0 : index
    %c0_9 = arith.constant 0 : index
    %12 = vector.load %arg5[%c0_8, %c0_9] : memref<1x32xf32, #tpu.memory_space<vmem>>, vector<1x32xf32>
    %13 = vector.broadcast %12 : vector<1x32xf32> to vector<8x32xf32>
    %14 = arith.addf %11, %13 : vector<8x32xf32>
    %15 = math.tanh %14 : vector<8x32xf32>
    %c0_10 = arith.constant 0 : index
    %c0_11 = arith.constant 0 : index
    %16 = vector.load %arg6[%c0_10, %c0_11] : memref<32x4xf32, #tpu.memory_space<vmem>>, vector<32x4xf32>
    %cst_12 = arith.constant dense<0.000000e+00> : vector<8x4xf32>
    %17 = tpu.matmul %15, %16, %cst_12 {dimension_numbers = #tpu.dot_dimension_numbers<[1], [0], [0], [1], [0, 0, 1, 1], [], []>} : vector<8x32xf32>, vector<32x4xf32>, vector<8x4xf32> -> vector<8x4xf32>
    %c0_13 = arith.constant 0 : index
    %c0_14 = arith.constant 0 : index
    %18 = vector.load %arg7[%c0_13, %c0_14] : memref<1x4xf32, #tpu.memory_space<vmem>>, vector<1x4xf32>
    %19 = vector.broadcast %18 : vector<1x4xf32> to vector<8x4xf32>
    %20 = arith.addf %17, %19 : vector<8x4xf32>
    %c0_15 = arith.constant 0 : index
    %c0_16 = arith.constant 0 : index
    %21 = vector.load %arg8[%c0_15, %c0_16] : memref<2x4xf32, #tpu.memory_space<vmem>>, vector<2x4xf32>
    %22 = vector.extract_strided_slice %21 {offsets = [0, 0], sizes = [1, 4], strides = [1, 1]} : vector<2x4xf32> to vector<1x4xf32>
    %23 = vector.extract_strided_slice %21 {offsets = [1, 0], sizes = [1, 4], strides = [1, 1]} : vector<2x4xf32> to vector<1x4xf32>
    %24 = vector.broadcast %22 : vector<1x4xf32> to vector<8x4xf32>
    %25 = arith.mulf %24, %2 : vector<8x4xf32>
    %26 = arith.addf %20, %25 : vector<8x4xf32>
    %27 = arith.subf %3, %20 : vector<8x4xf32>
    %28 = vector.broadcast %23 : vector<1x4xf32> to vector<8x4xf32>
    %29 = arith.mulf %27, %28 : vector<8x4xf32>
    %30 = arith.mulf %29, %29 : vector<8x4xf32>
    %31 = arith.mulf %2, %2 : vector<8x4xf32>
    %32 = tpu.concatenate %30, %31 in 1 : vector<8x4xf32>, vector<8x4xf32> -> vector<8x8xf32>
    %c0_17 = arith.constant 0 : index
    %c0_18 = arith.constant 0 : index
    %33 = vector.load %arg9[%c0_17, %c0_18] : memref<8x2xf32, #tpu.memory_space<vmem>>, vector<8x2xf32>
    %cst_19 = arith.constant dense<0.000000e+00> : vector<8x2xf32>
    %34 = tpu.matmul %32, %33, %cst_19 {dimension_numbers = #tpu.dot_dimension_numbers<[1], [0], [0], [1], [0, 0, 1, 1], [], []>} : vector<8x8xf32>, vector<8x2xf32>, vector<8x2xf32> -> vector<8x2xf32>
    %c0_20 = arith.constant 0 : index
    %c0_21 = arith.constant 0 : index
    %35 = vector.load %arg10[%c0_20, %c0_21] : memref<1x2xf32, #tpu.memory_space<vmem>>, vector<1x2xf32>
    %36 = vector.broadcast %35 : vector<1x2xf32> to vector<8x2xf32>
    %37 = arith.addf %34, %36 : vector<8x2xf32>
    %38 = tpu.concatenate %26, %37 in 1 : vector<8x4xf32>, vector<8x2xf32> -> vector<8x6xf32>
    %c0_22 = arith.constant 0 : index
    %c0_23 = arith.constant 0 : index
    %39 = vector.load %arg11[%c0_22, %c0_23] : memref<8x6xf32, #tpu.memory_space<vmem>>, vector<8x6xf32>
    tpu.vector_store %arg11[%c0_22, %c0_23], %38 {strides = array<i32>} : memref<8x6xf32, #tpu.memory_space<vmem>>, vector<8x6xf32>,
    return
  }
  func.func @transform_0(%arg0: i32) -> (i32, i32) {
    %c0_i32 = arith.constant 0 : i32
    %c0_i32_0 = arith.constant 0 : i32
    return %arg0, %c0_i32 : i32, i32
  }
  func.func @transform_1(%arg0: i32) -> (i32, i32) {
    %c0_i32 = arith.constant 0 : i32
    %c0_i32_0 = arith.constant 0 : i32
    %c0_i32_1 = arith.constant 0 : i32
    return %c0_i32, %c0_i32_0 : i32, i32
  }
  func.func @transform_2(%arg0: i32) -> (i32, i32) {
    %c0_i32 = arith.constant 0 : i32
    %c0_i32_0 = arith.constant 0 : i32
    %c0_i32_1 = arith.constant 0 : i32
    return %c0_i32, %c0_i32_0 : i32, i32
  }
  func.func @transform_3(%arg0: i32) -> (i32, i32) {
    %c0_i32 = arith.constant 0 : i32
    %c0_i32_0 = arith.constant 0 : i32
    %c0_i32_1 = arith.constant 0 : i32
    return %c0_i32, %c0_i32_0 : i32, i32
  }
  func.func @transform_4(%arg0: i32) -> (i32, i32) {
    %c0_i32 = arith.constant 0 : i32
    %c0_i32_0 = arith.constant 0 : i32
    %c0_i32_1 = arith.constant 0 : i32
    return %c0_i32, %c0_i32_0 : i32, i32
  }
  func.func @transform_5(%arg0: i32) -> (i32, i32) {
    %c0_i32 = arith.constant 0 : i32
    %c0_i32_0 = arith.constant 0 : i32
    %c0_i32_1 = arith.constant 0 : i32
    return %c0_i32, %c0_i32_0 : i32, i32
  }
  func.func @transform_6(%arg0: i32) -> (i32, i32) {
    %c0_i32 = arith.constant 0 : i32
    %c0_i32_0 = arith.constant 0 : i32
    %c0_i32_1 = arith.constant 0 : i32
    return %c0_i32, %c0_i32_0 : i32, i32
  }
  func.func @transform_7(%arg0: i32) -> (i32, i32) {
    %c0_i32 = arith.constant 0 : i32
    %c0_i32_0 = arith.constant 0 : i32
    %c0_i32_1 = arith.constant 0 : i32
    return %c0_i32, %c0_i32_0 : i32, i32
  }
  func.func @transform_8(%arg0: i32) -> (i32, i32) {
    %c0_i32 = arith.constant 0 : i32
    %c0_i32_0 = arith.constant 0 : i32
    %c0_i32_1 = arith.constant 0 : i32
    return %c0_i32, %c0_i32_0 : i32, i32
  }
  func.func @transform_9(%arg0: i32) -> (i32, i32) {
    %c0_i32 = arith.constant 0 : i32
    %c0_i32_0 = arith.constant 0 : i32
    %c0_i32_1 = arith.constant 0 : i32
    return %c0_i32, %c0_i32_0 : i32, i32
  }
  func.func @transform_10(%arg0: i32) -> (i32, i32) {
    %c0_i32 = arith.constant 0 : i32
    %c0_i32_0 = arith.constant 0 : i32
    return %arg0, %c0_i32 : i32, i32
  }
}

</mosaic_0001>

<llo_original>
// kernel: tpu_custom_call.1
$region0: #{tpu_custom_call.1}
  #allocation0 [shape = 'u32[]', space=smem, size = 0x4, offset = 0x4, fixed_abs, tag = 'smem constant byte address 0x4 - core index']
  #allocation1 [shape = 'u32[72,128]{1,0:T(1,128)}', space=vmem, size = 0x9000, scoped, tag = 'internal scratch']
  %s0 = inlined_call_operand.hbm [shape: f32[8,24], index: 0, kind: input, shape index: {}]
  %s1 = inlined_call_operand.vmem [shape: f32[16,32], index: 1, kind: input, shape index: {}]
  %s2 = inlined_call_operand.hbm [shape: f32[1,32], index: 2, kind: input, shape index: {}]
  %s3 = inlined_call_operand.vmem [shape: f32[32,32], index: 3, kind: input, shape index: {}]
  %s4 = inlined_call_operand.hbm [shape: f32[1,32], index: 4, kind: input, shape index: {}]
  %s5 = inlined_call_operand.vmem [shape: f32[32,4], index: 5, kind: input, shape index: {}]
  %s6 = inlined_call_operand.hbm [shape: f32[1,4], index: 6, kind: input, shape index: {}]
  %s7 = inlined_call_operand.vmem [shape: f32[2,4], index: 7, kind: input, shape index: {}]
  %s8 = inlined_call_operand.vmem [shape: f32[8,2], index: 8, kind: input, shape index: {}]
  %s9 = inlined_call_operand.vmem [shape: f32[1,2], index: 9, kind: input, shape index: {}]
  %s10 = inlined_call_operand.hbm [shape: f32[8,6], index: 10, kind: output, shape index: {}]
  %s11 = sld [smem:[#allocation0]]
  $region66: #{tpu_custom_call.1} parent=0
    _
  %s13 = ssub.s32 1, %s11
  %s14 = scalar_select 0, %s13, %s11
  $region1: #{tpu_custom_call.1} parent=0
    #allocation2 [shape = 'u8[4096]{0}', space=vmem, size = 0x1000, scoped, tag = 'input window, operand 0, single buffered']
    #allocation3 [shape = 's32[1]{0}', space=sflag, size = 0x4, scoped, tag = 'scoped memory for tpu_custom_call.1']
    #allocation4 [shape = 's32[1]{0}', space=sflag, size = 0x4, scoped, tag = 'scoped memory for tpu_custom_call.1']
    #allocation5 [shape = 'u8[512]{0}', space=vmem, size = 0x400, scoped, tag = 'input window, operand 2, single buffered']
    #allocation6 [shape = 's32[1]{0}', space=sflag, size = 0x4, scoped, tag = 'scoped memory for tpu_custom_call.1']
    #allocation7 [shape = 'u8[512]{0}', space=vmem, size = 0x400, scoped, tag = 'input window, operand 4, single buffered']
    #allocation8 [shape = 'u8[512]{0}', space=vmem, size = 0x400, scoped, tag = 'input window, operand 6, single buffered']
    #allocation9 [shape = 's32[1]{0}', space=sflag, size = 0x4, scoped, tag = 'scoped memory for tpu_custom_call.1']
    #allocation10 [shape = 'u8[4096]{0}', space=vmem, size = 0x1000, scoped, tag = 'output window, operand 0, single buffered']
    %15 = vsyncpa [#allocation3], 0
    %16 = vsyncpa [#allocation6], 0
    %17 = vsyncpa [#allocation9], 0
    %18 = vsyncpa [#allocation4], 0
    // Predicated region
    $region2: #{tpu_custom_call.1} parent=1 // pred_check
      _
    $region3: #{tpu_custom_call.1} parent=1 // pred_check_branch
      %20 = sbr.rel (0) target = $region5
    $region4: #{tpu_custom_call.1} parent=1 // pred_region
      %22 = vsyncadd [#allocation3], 0
      %s24 = sshll.u32 %s0, 4
      %s25 = int_to_ptr.hbm [resolvable:$true] %s24
      %s26 = sshll.u32 [#allocation2], 4
      %s27 = int_to_ptr.vmem [resolvable:$true] %s26
      %29 = dma.hbm_to_vmem [thread:$0]  %s25, 128, %s27, [#allocation3]
    $region5: #{tpu_custom_call.1} parent=1 // pred_fallthru
      _
    // Predicated region
    $region6: #{tpu_custom_call.1} parent=1 // pred_check
      _
    $region7: #{tpu_custom_call.1} parent=1 // pred_check_branch
      %31 = sbr.rel (0) target = $region9
    $region8: #{tpu_custom_call.1} parent=1 // pred_region
      _
    $region9: #{tpu_custom_call.1} parent=1 // pred_fallthru
      _
    // Predicated region
    $region10: #{tpu_custom_call.1} parent=1 // pred_check
      _
    $region11: #{tpu_custom_call.1} parent=1 // pred_check_branch
      %33 = sbr.rel (0) target = $region13
    $region12: #{tpu_custom_call.1} parent=1 // pred_region
      %35 = vsyncadd [#allocation6], 0
      %s37 = sshll.u32 %s2, 4
      %s38 = int_to_ptr.hbm [resolvable:$true] %s37
      %s39 = sshll.u32 [#allocation5], 4
      %s40 = int_to_ptr.vmem [resolvable:$true] %s39
      %42 = dma.hbm_to_vmem [thread:$0]  %s38, 16, %s40, [#allocation6]
    $region13: #{tpu_custom_call.1} parent=1 // pred_fallthru
      _
    // Predicated region
    $region14: #{tpu_custom_call.1} parent=1 // pred_check
      _
    $region15: #{tpu_custom_call.1} parent=1 // pred_check_branch
      %44 = sbr.rel (0) target = $region17
    $region16: #{tpu_custom_call.1} parent=1 // pred_region
      _
    $region17: #{tpu_custom_call.1} parent=1 // pred_fallthru
      _
    // Predicated region
    $region18: #{tpu_custom_call.1} parent=1 // pred_check
      _
    $region19: #{tpu_custom_call.1} parent=1 // pred_check_branch
      %46 = sbr.rel (0) target = $region21
    $region20: #{tpu_custom_call.1} parent=1 // pred_region
      %48 = vsyncadd [#allocation6], 0
      %s50 = sshll.u32 %s4, 4
      %s51 = int_to_ptr.hbm [resolvable:$true] %s50
      %s52 = sshll.u32 [#allocation7], 4
      %s53 = int_to_ptr.vmem [resolvable:$true] %s52
      %55 = dma.hbm_to_vmem [thread:$0]  %s51, 16, %s53, [#allocation6]
    $region21: #{tpu_custom_call.1} parent=1 // pred_fallthru
      _
    // Predicated region
    $region22: #{tpu_custom_call.1} parent=1 // pred_check
      _
    $region23: #{tpu_custom_call.1} parent=1 // pred_check_branch
      %57 = sbr.rel (0) target = $region25
    $region24: #{tpu_custom_call.1} parent=1 // pred_region
      _
    $region25: #{tpu_custom_call.1} parent=1 // pred_fallthru
      _
    // Predicated region
    $region26: #{tpu_custom_call.1} parent=1 // pred_check
      _
    $region27: #{tpu_custom_call.1} parent=1 // pred_check_branch
      %59 = sbr.rel (0) target = $region29
    $region28: #{tpu_custom_call.1} parent=1 // pred_region
      %61 = vsyncadd [#allocation9], 0
      %s63 = sshll.u32 %s6, 4
      %s64 = int_to_ptr.hbm [resolvable:$true] %s63
      %s65 = sshll.u32 [#allocation8], 4
      %s66 = int_to_ptr.vmem [resolvable:$true] %s65
      %68 = dma.hbm_to_vmem [thread:$0]  %s64, 16, %s66, [#allocation9]
    $region29: #{tpu_custom_call.1} parent=1 // pred_fallthru
      _
    // Predicated region
    $region30: #{tpu_custom_call.1} parent=1 // pred_check
      _
    $region31: #{tpu_custom_call.1} parent=1 // pred_check_branch
      %70 = sbr.rel (0) target = $region33
    $region32: #{tpu_custom_call.1} parent=1 // pred_region
      _
    $region33: #{tpu_custom_call.1} parent=1 // pred_fallthru
      _
    // Predicated region
    $region34: #{tpu_custom_call.1} parent=1 // pred_check
      _
    $region35: #{tpu_custom_call.1} parent=1 // pred_check_branch
      %72 = sbr.rel (0) target = $region37
    $region36: #{tpu_custom_call.1} parent=1 // pred_region
      _
    $region37: #{tpu_custom_call.1} parent=1 // pred_fallthru
      _
    // Predicated region
    $region38: #{tpu_custom_call.1} parent=1 // pred_check
      _
    $region39: #{tpu_custom_call.1} parent=1 // pred_check_branch
      %74 = sbr.rel (0) target = $region41
    $region40: #{tpu_custom_call.1} parent=1 // pred_region
      _
    $region41: #{tpu_custom_call.1} parent=1 // pred_fallthru
      _
    // Predicated region
    $region42: #{tpu_custom_call.1} parent=1 // pred_check
      _
    $region43: #{tpu_custom_call.1} parent=1 // pred_check_branch
      %76 = sbr.rel (0) target = $region45
    $region44: #{tpu_custom_call.1} parent=1 // pred_region
      %78 = dma.done [#allocation3], 128
    $region45: #{tpu_custom_call.1} parent=1 // pred_fallthru
      _
    // Predicated region
    $region46: #{tpu_custom_call.1} parent=1 // pred_check
      _
    $region47: #{tpu_custom_call.1} parent=1 // pred_check_branch
      %80 = sbr.rel (0) target = $region49
    $region48: #{tpu_custom_call.1} parent=1 // pred_region
      %82 = dma.done [#allocation6], 16
    $region49: #{tpu_custom_call.1} parent=1 // pred_fallthru
      _
    // Predicated region
    $region50: #{tpu_custom_call.1} parent=1 // pred_check
      _
    $region51: #{tpu_custom_call.1} parent=1 // pred_check_branch
      %84 = sbr.rel (0) target = $region53
    $region52: #{tpu_custom_call.1} parent=1 // pred_region
      %86 = dma.done [#allocation6], 16
    $region53: #{tpu_custom_call.1} parent=1 // pred_fallthru
      _
    // Predicated region
    $region54: #{tpu_custom_call.1} parent=1 // pred_check
      _
    $region55: #{tpu_custom_call.1} parent=1 // pred_check_branch
      %88 = sbr.rel (0) target = $region57
    $region56: #{tpu_custom_call.1} parent=1 // pred_region
      %90 = dma.done [#allocation9], 16
    $region57: #{tpu_custom_call.1} parent=1 // pred_fallthru
      _
    %v91 = vld [vmem:[#allocation2] sm:$0xff]
    %v92 = vld [vmem:[%s1] sm:$0xff]
    %v93 = vld [vmem:[%s1 + $0x8] sm:$0xff]
    %v94 = vld [vmem:[#allocation5] sm:$0x1]
    %v96 = vperm.slane %v94, 0
    %vm98 = vcmask 130048
    %v100 = vsel %vm98, %v91, 0
    %102 = vmatpush.msra.mxu0 0.0
    %103 = vmatpush.msra.mxu0 0.0
    %104 = vmatpush.msra.mxu0 0.0
    %105 = vmatpush.msra.mxu0 0.0
    %106 = vmatpush.msra.mxu0 0.0
    %107 = vmatpush.msra.mxu0 0.0
    %108 = vmatpush.msra.mxu0 0.0
    %109 = vmatpush.msra.mxu0 0.0
    %110 = vmatpush.msra.mxu0 0.0
    %111 = vmatpush.msra.mxu0 0.0
    %112 = vmatpush.msra.mxu0 0.0
    %113 = vmatpush.msra.mxu0 0.0
    %114 = vmatpush.msra.mxu0 0.0
    %115 = vmatpush.msra.mxu0 0.0
    %116 = vmatpush.msra.mxu0 %v93
    %117 = vmatpush.msra.mxu0 %v92
    %118 = vmatmul.f32.gmra.mxu0 %v100
    %v119 = vpop.f32.mrf.mxu0
    %v120 = vadd.f32 %v96, %v119
    %121 = vdwg.mxu0
    %v122 = vtanh.pop %v120
    %v123 = vld [vmem:[%s3] sm:$0xff]
    %v124 = vld [vmem:[%s3 + $0x8] sm:$0xff]
    %v125 = vld [vmem:[%s3 + $0x10] sm:$0xff]
    %v126 = vld [vmem:[%s3 + $0x18] sm:$0xff]
    %v127 = vld [vmem:[#allocation7] sm:$0x1]
    %v129 = vperm.slane %v127, 0
    %vm131 = vcmask 261120
    %v133 = vsel %vm131, %v122, 0
    %135 = vmatpush.msra.mxu0 0.0
    %136 = vmatpush.msra.mxu0 0.0
    %137 = vmatpush.msra.mxu0 0.0
    %138 = vmatpush.msra.mxu0 0.0
    %139 = vmatpush.msra.mxu0 0.0
    %140 = vmatpush.msra.mxu0 0.0
    %141 = vmatpush.msra.mxu0 0.0
    %142 = vmatpush.msra.mxu0 0.0
    %143 = vmatpush.msra.mxu0 0.0
    %144 = vmatpush.msra.mxu0 0.0
    %145 = vmatpush.msra.mxu0 0.0
    %146 = vmatpush.msra.mxu0 0.0
    %147 = vmatpush.msra.mxu0 %v126
    %148 = vmatpush.msra.mxu0 %v125
    %149 = vmatpush.msra.mxu0 %v124
    %150 = vmatpush.msra.mxu0 %v123
    %151 = vmatmul.f32.gmra.mxu0 %v133
    %v152 = vpop.f32.mrf.mxu0
    %v153 = vadd.f32 %v129, %v152
    %154 = vdwg.mxu0
    %v155 = vtanh.pop %v153
    %v156 = vld [vmem:[%s5] sm:$0xff]
    %v157 = vld [vmem:[%s5 + $0x8] sm:$0xff]
    %v158 = vld [vmem:[%s5 + $0x10] sm:$0xff]
    %v159 = vld [vmem:[%s5 + $0x18] sm:$0xff]
    %v160 = vld [vmem:[#allocation8] sm:$0x1]
    %v162 = vperm.slane %v160, 0
    %v165 = vsel %vm131, %v155, 0
    %167 = vmatpush.msra.mxu0 0.0
    %168 = vmatpush.msra.mxu0 0.0
    %169 = vmatpush.msra.mxu0 0.0
    %170 = vmatpush.msra.mxu0 0.0
    %171 = vmatpush.msra.mxu0 0.0
    %172 = vmatpush.msra.mxu0 0.0
    %173 = vmatpush.msra.mxu0 0.0
    %174 = vmatpush.msra.mxu0 0.0
    %175 = vmatpush.msra.mxu0 0.0
    %176 = vmatpush.msra.mxu0 0.0
    %177 = vmatpush.msra.mxu0 0.0
    %178 = vmatpush.msra.mxu0 0.0
    %179 = vmatpush.msra.mxu0 %v159
    %180 = vmatpush.msra.mxu0 %v158
    %181 = vmatpush.msra.mxu0 %v157
    %182 = vmatpush.msra.mxu0 %v156
    %183 = vmatmul.f32.gmra.mxu0 %v165
    %v184 = vpop.f32.mrf.mxu0
    %v185 = vadd.f32 %v162, %v184
    %186 = vdwg.mxu0
    %v187 = vld [vmem:[%s7] sm:$0x3]
    %v188 = vperm.slane %v187, 0
    %189 = vrot.lane.b32.xlu0 %v91, 112
    %v190 = vpop.permute.xlu0 %189
    %v192 = vmul.f32 %v188, %v190
    %v193 = vadd.f32 %v185, %v192
    %195 = vrot.lane.b32.xlu0 %v185, 20
    %v196 = vpop.permute.xlu0 %195
    %v198 = vsub.f32 %v91, %v196
    %v199 = vperm.slane %v187, 1
    %201 = vrot.lane.b32.xlu0 %v199, 20
    %v202 = vpop.permute.xlu0 %201
    %v204 = vmul.f32 %v198, %v202
    %v205 = vmul.f32 %v204, %v204
    %v206 = vmul.f32 %v91, %v91
    %208 = vrot.lane.b32.xlu0 %v205, 108
    %v209 = vpop.permute.xlu0 %208
    %212 = vrot.lane.b32.xlu0 %v206, 116
    %v213 = vpop.permute.xlu0 %212
    %vm215 = vcmask 31744
    %v216 = vsel %vm215, %v209, %v213
    %v217 = vld [vmem:[%s8] sm:$0xff]
    %v218 = vld [vmem:[%s9] sm:$0x1]
    %v220 = vperm.slane %v218, 0
    %vm222 = vcmask 64512
    %v224 = vsel %vm222, %v216, 0
    %226 = vmatpush.msra.mxu0 0.0
    %227 = vmatpush.msra.mxu0 0.0
    %228 = vmatpush.msra.mxu0 0.0
    %229 = vmatpush.msra.mxu0 0.0
    %230 = vmatpush.msra.mxu0 0.0
    %231 = vmatpush.msra.mxu0 0.0
    %232 = vmatpush.msra.mxu0 0.0
    %233 = vmatpush.msra.mxu0 0.0
    %234 = vmatpush.msra.mxu0 0.0
    %235 = vmatpush.msra.mxu0 0.0
    %236 = vmatpush.msra.mxu0 0.0
    %237 = vmatpush.msra.mxu0 0.0
    %238 = vmatpush.msra.mxu0 0.0
    %239 = vmatpush.msra.mxu0 0.0
    %240 = vmatpush.msra.mxu0 0.0
    %241 = vmatpush.msra.mxu0 %v217
    %242 = vmatmul.f32.gmra.mxu0 %v224
    %v243 = vpop.f32.mrf.mxu0
    %v244 = vadd.f32 %v220, %v243
    %245 = vdwg.mxu0
    %247 = vrot.lane.b32.xlu0 %v244, 4
    %v248 = vpop.permute.xlu0 %247
    %v250 = vsel %vm215, %v193, %v248
    %vm251 = vcmask 48128
    %252 = vst.msk [vmem:[#allocation10] sm:$0xff] %vm251, %v250
    // Predicated region
    $region58: #{tpu_custom_call.1} parent=1 // pred_check
      _
    $region59: #{tpu_custom_call.1} parent=1 // pred_check_branch
      %254 = sbr.rel (0) target = $region61
    $region60: #{tpu_custom_call.1} parent=1 // pred_region
      %256 = vsyncadd [#allocation4], 0
      %s258 = sshll.u32 [#allocation10], 4
      %s259 = int_to_ptr.vmem [resolvable:$true] %s258
      %s260 = sshll.u32 %s10, 4
      %s261 = int_to_ptr.hbm [resolvable:$true] %s260
      %263 = dma.vmem_to_hbm [thread:$0]  %s259, 128, %s261, [#allocation4]
    $region61: #{tpu_custom_call.1} parent=1 // pred_fallthru
      _
    // Predicated region
    $region62: #{tpu_custom_call.1} parent=1 // pred_check
      _
    $region63: #{tpu_custom_call.1} parent=1 // pred_check_branch
      %265 = sbr.rel (0) target = $region65
    $region64: #{tpu_custom_call.1} parent=1 // pred_region
      %267 = dma.done [#allocation4], 128
    $region65: #{tpu_custom_call.1} parent=1 // pred_fallthru
      _
    %268 = vsyncpa [#allocation3], 1
    %269 = vsyncpa [#allocation6], 1
    %270 = vsyncpa [#allocation9], 1
    %271 = vsyncpa [#allocation4], 1

</llo_original>
